<compile_context>
chip_gen: v6e
topology: v6e:2x2x1
jax: 0.10.0
libtpu: 0.0.40
codegen_flags: <defaults>
</compile_context>

<pallas_src>
import jax
import jax.numpy as jnp
import numpy as np
from jax.experimental import pallas as pl
from jax.experimental.pallas import tpu as pltpu


# ------------------------------ Pallas kernel --------------------------------

def _affine_kernel(rsel_ref, cselT_ref, img_ref, out_ref):
    """Warp T image slices: out[t] = rsel @ img[t] @ cselT (one-hot gathers).

    rsel_ref : (H_out, H_in)  one-hot row-selection matrix, image dtype
    cselT_ref: (W_in,  TW)    one-hot column-selection matrix (this column tile)
    img_ref  : (T, H, W_in)   input slice tile
    out_ref  : (T, H, TW)     output slice tile
    """
    T = img_ref.shape[0]
    dt = out_ref.dtype
    rsel = rsel_ref[...]
    cselT = cselT_ref[...]

    def warp_one(t):
        # Chain keeps only an (H, TW) intermediate live; one-hot matmuls are exact
        # in the image dtype, so no f32 accumulator / cast is needed.
        y = jnp.dot(img_ref[t], cselT, preferred_element_type=dt)
        out_ref[t] = jnp.dot(rsel, y, preferred_element_type=dt)

    if T <= 8:
        for t in range(T):                      # static unroll: small, LLO-visible
            warp_one(t)
    else:
        def body(t, carry):
            warp_one(t)
            return carry
        jax.lax.fori_loop(0, T, body, 0, unroll=4)
    # TODO(synk): on v5e the row gather could be done at DMA time (sublane gather)
    # instead of a one-hot matmul, halving MXU FLOPs when H ~ W.


# ------------------------------ helpers --------------------------------------

def _nearest_src_indices(n, shift, scale):
    """Source index per output index for torchvision TF.affine with angle=0,
    shear=0 (nearest, zero fill).  -1 marks out-of-range (=> zero fill)."""
    out = jnp.arange(n, dtype=jnp.float32)
    src = (out - n * 0.5 + 0.5 - shift) / scale + (n - 1) * 0.5
    # TODO(synk): jnp.rint is round-half-to-even; torchvision nearest may differ
    # for sources landing exactly on .5 (edge case only).
    idx = jnp.rint(src).astype(jnp.int32)
    return jnp.where((idx >= 0) & (idx < n), idx, -1)


def _vmem_limit_bytes():
    """Generation-aware scoped-VMEM limit: 48 MiB on 128 MiB chips (v5e/v6e),
    ~38 MiB on v7x (64 MiB physical), conservative fallback otherwise."""
    cap = 64 << 20
    try:
        info = pltpu.get_tpu_info()
        cap = int(getattr(info, "vmem_capacity_bytes", cap))
    except Exception:
        pass
    return min(48 << 20, int(cap * 0.6))


def _step_bytes(t, h, w, tw, itemsize):
    """Approximate per-step VMEM footprint (double-buffered blocks + live temps)."""
    img_in = 2 * t * h * w * itemsize          # input slice tile
    img_out = 2 * t * h * tw * itemsize        # output slice tile
    sel = 2 * (h * h + w * tw) * itemsize      # rsel + cselT blocks
    interm = 2 * h * tw * max(itemsize, 4)     # per-t chain intermediate + slack
    return img_in + img_out + sel + interm


def _pick_col_tile(w, h, itemsize, budget_bytes):
    """Largest multiple-of-128 divisor of W whose T=1 footprint fits the budget."""
    cands = sorted((d for d in range(128, w + 1, 128) if w % d == 0), reverse=True)
    if not cands:
        # TODO(synk): pad W to a lane-aligned multiple for widths with no aligned
        # divisor instead of falling back to full width.
        return w
    for tw in cands:
        if _step_bytes(1, h, w, tw, itemsize) <= budget_bytes:
            return tw
    return cands[-1]


def _pick_nc_tile(nc, h, w, tw, itemsize, budget_bytes, col_steps):
    """Largest slice-tile T dividing NC that fits the budget.  Only when the
    column axis provides no parallelism do we (softly) prefer >=2 grid steps so
    v7x megacore has something to split; on v5e/v6e the cost is at most one
    halving of T and only in that single-column case."""
    fits = [t for t in range(1, nc + 1)
            if nc % t == 0 and _step_bytes(t, h, w, tw, itemsize) <= budget_bytes]
    if not fits:
        return 1
    if col_steps == 1 and nc >= 2:
        two = [t for t in fits if nc // t >= 2]
        if two:
            return max(two)
    return max(fits)


# ------------------------------ wrapper ---------------------------------------

def random_affine(img, bboxes, key, *, translate=(0.1, 0.1),
                  scale_range=(0.8, 1.2)):
    """Pallas implementation of RandomAffine.forward.

    img:    (N, C, H, W) float32/bfloat16 (NCHW, as in PyTorch)
    bboxes: (B, 5)       [cls, cx, cy, w, h], normalized coords
    Returns (img_out, bboxes_out, (tx, ty, scale)); fully jittable.
    """
    N, C, H, W = img.shape
    k1, k2, k3 = jax.random.split(key, 3)

    # ---- on-device parameter sampling (no host sync, no per-call constants) ----
    if translate is not None:
        max_dx = float(translate[0]) * W     # img_size[0] == width
        max_dy = float(translate[1]) * H     # img_size[1] == height
        tx = jnp.round(jax.random.uniform(k1, (), minval=-max_dx, maxval=max_dx)
                       ).astype(jnp.int32)
        ty = jnp.round(jax.random.uniform(k2, (), minval=-max_dy, maxval=max_dy)
                       ).astype(jnp.int32)
    else:
        tx = jnp.int32(0)
        ty = jnp.int32(0)
    if scale_range is not None:
        scale = jax.random.uniform(k3, (), minval=scale_range[0],
                                   maxval=scale_range[1], dtype=jnp.float32)
    else:
        scale = jnp.float32(1.0)

    # ---- one-hot selection matrices, built once on-device (hoisted from kernel) ----
    src_row = _nearest_src_indices(H, ty.astype(jnp.float32), scale)    # (H,)
    src_col = _nearest_src_indices(W, tx.astype(jnp.float32), scale)    # (W,)
    rsel = (src_row[:, None] ==
            jnp.arange(H, dtype=jnp.int32)[None, :]).astype(img.dtype)   # (H_out, H_in)
    cselT = (jnp.arange(W, dtype=jnp.int32)[:, None] ==
             src_col[None, :]).astype(img.dtype)                         # (W_in, W_out)

    # ---- bbox transform in plain jnp (fused by XLA, removed from the kernel) ----
    txn = tx.astype(jnp.float32) / W
    tyn = ty.astype(jnp.float32) / H
    one = jnp.float32(1.0)
    zero = jnp.float32(0.0)
    mul = jnp.stack([one, scale, scale, scale, scale])
    off = jnp.stack([zero, txn + 0.5 - 0.5 * scale, tyn + 0.5 - 0.5 * scale,
                     zero, zero])
    bboxes_out = (bboxes * mul[None, :] + off[None, :]).astype(bboxes.dtype)

    # ---- generation-aware grid / tiling ----
    NC = N * C
    isz = img.dtype.itemsize
    vmem_limit = _vmem_limit_bytes()
    budget = int(vmem_limit * 0.8)
    TW = _pick_col_tile(W, H, isz, budget)
    col_steps = W // TW
    T = _pick_nc_tile(NC, H, W, TW, isz, budget, col_steps)
    grid = (NC // T, col_steps)

    # Advisory cost so XLA overlaps the surrounding jnp work with the kernel.
    flops = int(2 * NC * H * W * (W + H))
    bytes_accessed = int((2 * NC * H * W + H * H + W * W) * isz)
    cost = pl.CostEstimate(flops=flops, transcendentals=0,
                           bytes_accessed=bytes_accessed)

    img_flat = img.reshape(NC, H, W)
    img_out_flat = pl.pallas_call(
        _affine_kernel,
        out_shape=jax.ShapeDtypeStruct((NC, H, W), img.dtype),
        grid=grid,
        in_specs=[
            pl.BlockSpec((H, H), lambda i, j: (0, 0)),        # rsel (grid-invariant)
            pl.BlockSpec((W, TW), lambda i, j: (0, j)),       # cselT (per column tile)
            pl.BlockSpec((T, H, W), lambda i, j: (i, 0, 0)),  # image slice tile
        ],
        out_specs=pl.BlockSpec((T, H, TW), lambda i, j: (i, 0, j)),
        compiler_params=pltpu.CompilerParams(
            dimension_semantics=("parallel", "parallel"),
            vmem_limit_bytes=vmem_limit,
        ),
        cost_estimate=cost,
    )(rsel, cselT, img_flat)

    return img_out_flat.reshape(N, C, H, W), bboxes_out, (tx, ty, scale)


# ------------------------------ demo / check ----------------------------------

if __name__ == "__main__":
    key = jax.random.PRNGKey(0)
    k_img, k_bb, k_aff = jax.random.split(key, 3)

    N, C, H, W, B = 2, 4, 16, 16, 3
    img = jax.random.uniform(k_img, (N, C, H, W), dtype=jnp.float32)
    bb_xywh = jax.random.uniform(k_bb, (B, 4), dtype=jnp.float32)
    cls_col = jnp.arange(B, dtype=jnp.float32)[:, None]
    bboxes = jnp.concatenate([cls_col, bb_xywh], axis=1)         # (B, 5)

    fn = jax.jit(random_affine, static_argnames=("translate", "scale_range"))
    img_out, bboxes_out, (tx, ty, scale) = fn(
        img, bboxes, k_aff, translate=(0.1, 0.1), scale_range=(0.8, 1.2))
    img_out = jax.block_until_ready(img_out)
    bboxes_out = jax.block_until_ready(bboxes_out)

    # ---- plain-JAX reference (same index helper => identical rounding) ----
    src_row = _nearest_src_indices(H, ty.astype(jnp.float32), scale)   # (H,)
    src_col = _nearest_src_indices(W, tx.astype(jnp.float32), scale)   # (W,)
    rvalid = src_row >= 0
    cvalid = src_col >= 0
    gr = jnp.clip(src_row, 0, H - 1)
    gc = jnp.clip(src_col, 0, W - 1)
    ref_img = img[:, :, gr, :][:, :, :, gc]
    ref_img = ref_img * (rvalid[:, None] & cvalid[None, :]).astype(img.dtype)

    txn = tx.astype(jnp.float32) / W
    tyn = ty.astype(jnp.float32) / H
    ref_bb = bboxes.at[:, 1].set(scale * (bboxes[:, 1] - 0.5) + txn + 0.5)
    ref_bb = ref_bb.at[:, 2].set(scale * (bboxes[:, 2] - 0.5) + tyn + 0.5)
    ref_bb = ref_bb.at[:, 3].set(bboxes[:, 3] * scale)
    ref_bb = ref_bb.at[:, 4].set(bboxes[:, 4] * scale)

    assert np.allclose(np.asarray(img_out), np.asarray(ref_img), atol=1e-5, rtol=1e-5)
    assert np.allclose(np.asarray(bboxes_out), np.asarray(ref_bb), atol=1e-5, rtol=1e-5)
    print("KERNEL_OK")
</pallas_src>

<mosaic_0001>
module attributes {stable_mosaic.version = 11 : i64} {
  func.func @_affine_kernel(%arg0: i32, %arg1: i32, %arg2: memref<16x16xf32, #tpu.memory_space<vmem>>, %arg3: memref<16x16xf32, #tpu.memory_space<vmem>>, %arg4: memref<4x16x16xf32, #tpu.memory_space<vmem>>, %arg5: memref<4x16x16xf32, #tpu.memory_space<vmem>>) attributes {dimension_semantics = [#tpu.dimension_semantics<parallel>, #tpu.dimension_semantics<parallel>], iteration_bounds = array<i64: 2, 1>, scalar_prefetch = 0 : i64, scratch_operands = 0 : i64, tpu.core_type = #tpu.core_type<tc>, window_params = [{pipeline_mode = #tpu.pipeline_mode<synchronous>, transform_indices = @transform_0, window_bounds = array<i64: 16, 16>}, {transform_indices = @transform_1, window_bounds = array<i64: 16, 16>}, {transform_indices = @transform_2, window_bounds = array<i64: 4, 16, 16>}, {transform_indices = @transform_3, window_bounds = array<i64: 4, 16, 16>}]} {
    %c0 = arith.constant 0 : index
    %c0_0 = arith.constant 0 : index
    %0 = vector.load %arg2[%c0, %c0_0] : memref<16x16xf32, #tpu.memory_space<vmem>>, vector<16x16xf32>
    %c0_1 = arith.constant 0 : index
    %c0_2 = arith.constant 0 : index
    %1 = vector.load %arg3[%c0_1, %c0_2] : memref<16x16xf32, #tpu.memory_space<vmem>>, vector<16x16xf32>
    %c0_3 = arith.constant 0 : index
    %c0_4 = arith.constant 0 : index
    %c0_5 = arith.constant 0 : index
    %2 = vector.load %arg4[%c0_3, %c0_4, %c0_5] : memref<4x16x16xf32, #tpu.memory_space<vmem>>, vector<1x16x16xf32>
    %3 = vector.shape_cast %2 : vector<1x16x16xf32> to vector<16x16xf32>
    %cst = arith.constant dense<0.000000e+00> : vector<16x16xf32>
    %4 = tpu.matmul %3, %1, %cst {dimension_numbers = #tpu.dot_dimension_numbers<[1], [0], [0], [1], [0, 0, 1, 1], [], []>} : vector<16x16xf32>, vector<16x16xf32>, vector<16x16xf32> -> vector<16x16xf32>
    %cst_6 = arith.constant dense<0.000000e+00> : vector<16x16xf32>
    %5 = tpu.matmul %0, %4, %cst_6 {dimension_numbers = #tpu.dot_dimension_numbers<[1], [0], [0], [1], [0, 0, 1, 1], [], []>} : vector<16x16xf32>, vector<16x16xf32>, vector<16x16xf32> -> vector<16x16xf32>
    %c0_7 = arith.constant 0 : index
    %c0_8 = arith.constant 0 : index
    %c0_9 = arith.constant 0 : index
    %6 = vector.load %arg5[%c0_7, %c0_8, %c0_9] : memref<4x16x16xf32, #tpu.memory_space<vmem>>, vector<1x16x16xf32>
    %7 = vector.shape_cast %6 : vector<1x16x16xf32> to vector<16x16xf32>
    %8 = vector.shape_cast %5 : vector<16x16xf32> to vector<1x16x16xf32>
    tpu.vector_store %arg5[%c0_7, %c0_8, %c0_9], %8 {strides = array<i32>} : memref<4x16x16xf32, #tpu.memory_space<vmem>>, vector<1x16x16xf32>,
    %c1 = arith.constant 1 : index
    %c0_10 = arith.constant 0 : index
    %c0_11 = arith.constant 0 : index
    %9 = vector.load %arg4[%c1, %c0_10, %c0_11] : memref<4x16x16xf32, #tpu.memory_space<vmem>>, vector<1x16x16xf32>
    %10 = vector.shape_cast %9 : vector<1x16x16xf32> to vector<16x16xf32>
    %cst_12 = arith.constant dense<0.000000e+00> : vector<16x16xf32>
    %11 = tpu.matmul %10, %1, %cst_12 {dimension_numbers = #tpu.dot_dimension_numbers<[1], [0], [0], [1], [0, 0, 1, 1], [], []>} : vector<16x16xf32>, vector<16x16xf32>, vector<16x16xf32> -> vector<16x16xf32>
    %cst_13 = arith.constant dense<0.000000e+00> : vector<16x16xf32>
    %12 = tpu.matmul %0, %11, %cst_13 {dimension_numbers = #tpu.dot_dimension_numbers<[1], [0], [0], [1], [0, 0, 1, 1], [], []>} : vector<16x16xf32>, vector<16x16xf32>, vector<16x16xf32> -> vector<16x16xf32>
    %c1_14 = arith.constant 1 : index
    %c0_15 = arith.constant 0 : index
    %c0_16 = arith.constant 0 : index
    %13 = vector.load %arg5[%c1_14, %c0_15, %c0_16] : memref<4x16x16xf32, #tpu.memory_space<vmem>>, vector<1x16x16xf32>
    %14 = vector.shape_cast %13 : vector<1x16x16xf32> to vector<16x16xf32>
    %15 = vector.shape_cast %12 : vector<16x16xf32> to vector<1x16x16xf32>
    tpu.vector_store %arg5[%c1_14, %c0_15, %c0_16], %15 {strides = array<i32>} : memref<4x16x16xf32, #tpu.memory_space<vmem>>, vector<1x16x16xf32>,
    %c2 = arith.constant 2 : index
    %c0_17 = arith.constant 0 : index
    %c0_18 = arith.constant 0 : index
    %16 = vector.load %arg4[%c2, %c0_17, %c0_18] : memref<4x16x16xf32, #tpu.memory_space<vmem>>, vector<1x16x16xf32>
    %17 = vector.shape_cast %16 : vector<1x16x16xf32> to vector<16x16xf32>
    %cst_19 = arith.constant dense<0.000000e+00> : vector<16x16xf32>
    %18 = tpu.matmul %17, %1, %cst_19 {dimension_numbers = #tpu.dot_dimension_numbers<[1], [0], [0], [1], [0, 0, 1, 1], [], []>} : vector<16x16xf32>, vector<16x16xf32>, vector<16x16xf32> -> vector<16x16xf32>
    %cst_20 = arith.constant dense<0.000000e+00> : vector<16x16xf32>
    %19 = tpu.matmul %0, %18, %cst_20 {dimension_numbers = #tpu.dot_dimension_numbers<[1], [0], [0], [1], [0, 0, 1, 1], [], []>} : vector<16x16xf32>, vector<16x16xf32>, vector<16x16xf32> -> vector<16x16xf32>
    %c2_21 = arith.constant 2 : index
    %c0_22 = arith.constant 0 : index
    %c0_23 = arith.constant 0 : index
    %20 = vector.load %arg5[%c2_21, %c0_22, %c0_23] : memref<4x16x16xf32, #tpu.memory_space<vmem>>, vector<1x16x16xf32>
    %21 = vector.shape_cast %20 : vector<1x16x16xf32> to vector<16x16xf32>
    %22 = vector.shape_cast %19 : vector<16x16xf32> to vector<1x16x16xf32>
    tpu.vector_store %arg5[%c2_21, %c0_22, %c0_23], %22 {strides = array<i32>} : memref<4x16x16xf32, #tpu.memory_space<vmem>>, vector<1x16x16xf32>,
    %c3 = arith.constant 3 : index
    %c0_24 = arith.constant 0 : index
    %c0_25 = arith.constant 0 : index
    %23 = vector.load %arg4[%c3, %c0_24, %c0_25] : memref<4x16x16xf32, #tpu.memory_space<vmem>>, vector<1x16x16xf32>
    %24 = vector.shape_cast %23 : vector<1x16x16xf32> to vector<16x16xf32>
    %cst_26 = arith.constant dense<0.000000e+00> : vector<16x16xf32>
    %25 = tpu.matmul %24, %1, %cst_26 {dimension_numbers = #tpu.dot_dimension_numbers<[1], [0], [0], [1], [0, 0, 1, 1], [], []>} : vector<16x16xf32>, vector<16x16xf32>, vector<16x16xf32> -> vector<16x16xf32>
    %cst_27 = arith.constant dense<0.000000e+00> : vector<16x16xf32>
    %26 = tpu.matmul %0, %25, %cst_27 {dimension_numbers = #tpu.dot_dimension_numbers<[1], [0], [0], [1], [0, 0, 1, 1], [], []>} : vector<16x16xf32>, vector<16x16xf32>, vector<16x16xf32> -> vector<16x16xf32>
    %c3_28 = arith.constant 3 : index
    %c0_29 = arith.constant 0 : index
    %c0_30 = arith.constant 0 : index
    %27 = vector.load %arg5[%c3_28, %c0_29, %c0_30] : memref<4x16x16xf32, #tpu.memory_space<vmem>>, vector<1x16x16xf32>
    %28 = vector.shape_cast %27 : vector<1x16x16xf32> to vector<16x16xf32>
    %29 = vector.shape_cast %26 : vector<16x16xf32> to vector<1x16x16xf32>
    tpu.vector_store %arg5[%c3_28, %c0_29, %c0_30], %29 {strides = array<i32>} : memref<4x16x16xf32, #tpu.memory_space<vmem>>, vector<1x16x16xf32>,
    return
  }
  func.func @transform_0(%arg0: i32, %arg1: i32) -> (i32, i32) {
    %c0_i32 = arith.constant 0 : i32
    %c0_i32_0 = arith.constant 0 : i32
    %c0_i32_1 = arith.constant 0 : i32
    return %c0_i32, %c0_i32_0 : i32, i32
  }
  func.func @transform_1(%arg0: i32, %arg1: i32) -> (i32, i32) {
    %c0_i32 = arith.constant 0 : i32
    %c0_i32_0 = arith.constant 0 : i32
    return %c0_i32, %arg1 : i32, i32
  }
  func.func @transform_2(%arg0: i32, %arg1: i32) -> (i32, i32, i32) {
    %c0_i32 = arith.constant 0 : i32
    %c0_i32_0 = arith.constant 0 : i32
    %c0_i32_1 = arith.constant 0 : i32
    return %arg0, %c0_i32, %c0_i32_0 : i32, i32, i32
  }
  func.func @transform_3(%arg0: i32, %arg1: i32) -> (i32, i32, i32) {
    %c0_i32 = arith.constant 0 : i32
    %c0_i32_0 = arith.constant 0 : i32
    return %arg0, %c0_i32, %arg1 : i32, i32, i32
  }
}

</mosaic_0001>

<llo_original>
// kernel: random_affine.3
$region0: #{random_affine.3}
  #allocation0 [shape = 'u32[]', space=smem, size = 0x4, offset = 0x4, fixed_abs, tag = 'smem constant byte address 0x4 - core index']
  #allocation1 [shape = 'u32[144,128]{1,0:T(1,128)}', space=vmem, size = 0x12000, scoped, tag = 'internal scratch']
  %s0 = inlined_call_operand.vmem [shape: f32[16,16], index: 0, kind: input, shape index: {}]
  %s1 = inlined_call_operand.vmem [shape: f32[16,16], index: 1, kind: input, shape index: {}]
  %s2 = inlined_call_operand.vmem [shape: f32[8,16,16], index: 2, kind: input, shape index: {}]
  %s3 = inlined_call_operand.hbm [shape: f32[8,16,16], index: 3, kind: output, shape index: {}]
  %s4 = sld [smem:[#allocation0]]
  $region45: #{random_affine.3} parent=0
    _
  %s6 = ssub.s32 1, %s4
  %s7 = scalar_select 0, %s6, %s4
  $region1: #{random_affine.3} parent=0
    #allocation2 [shape = 'u8[65536]{0}', space=vmem, size = 0x10000, scoped, tag = 'output window, operand 0']
    #allocation3 [shape = 's32[2]{0}', space=sflag, size = 0x8, scoped, tag = 'scoped memory for random_affine.3']
    %8 = vsyncpa [#allocation3], 0
    %s9 = scalar_lea.sflag [#allocation3], 1
    %10 = vsyncpa %s9, 0
    loop: start=0, step=1, limit=4
    $region2: #{random_affine.3} parent=1 // loop_pre_header
      _
    $region3: #{random_affine.3} parent=1 // loop_header
      %s12 = sphi 0, %s16
      %p13 = scmp.ge.s32.totalorder %s12, 4
      %s19 = sphi 0, %s31
      %s20 = sphi 0, %s27
      %s21 = sphi 0, %s19
      %s22 = sphi 0, %s20
      %s23 = sphi 0, %s21
      %s24 = sphi 0, %s22
      %s32 = sphi 0, %s32
      %s34 = sphi 0, %s32
      %s35 = sphi 0, %s34
      %s49 = sphi 0, %s35
      %s55 = sphi 0, %s57
      %s58 = sphi 0, %s55
      %s59 = sphi 0, %s58
      %s75 = sphi 0, %s59
      %s81 = sphi 0, %s83
      %s84 = sphi 0, %s81
      %s85 = sphi 0, %s84
      %s101 = sphi 0, %s85
      %s109 = sphi 0, %s111
      %s112 = sphi 0, %s109
      %s113 = sphi 0, %s112
      %s129 = sphi 0, %s113
    $region4: #{random_affine.3} parent=1 // loop_header_branch
      %15 = sbr.rel (%p13) target = $region8
    $region5: #{random_affine.3} parent=1 // loop_body
      %s17 = ssub.s32 %s12, 1
      %s18 = ssub.s32 %s12, 2
      %s25 = sadd.s32 1, %s20
      %p26 = scmp.ge.s32.totalorder %s25, 1
      %s27 = scalar_select %p26, 0, %s25
      %s28 = sadd.s32 1, %s19
      %s29 = scalar_select %p26, %s28, %s19
      %p30 = scmp.ge.s32.totalorder %s29, 2
      %s31 = scalar_select %p30, 0, %s29
      %s33 = sadd.s32 %s32, 1
      %p36 = scmp.eq.s32.totalorder %s12, 1
      %p37 = scmp.ne.s32.totalorder %s32, %s34
      %p38 = scmp.eq.s32.totalorder %s12, 0
      %p39 = por %p37, %p38
      %p40 = scmp.ne.s32.totalorder %s32, %s34
      %p41 = scmp.eq.s32.totalorder %s17, 1
      %p42 = por %p40, %p41
      %p43 = scmp.ne.s32.totalorder %s34, %s35
      %p44 = scmp.eq.s32.totalorder %s17, 0
      %p45 = por %p43, %p44
      %p46 = scmp.ne.s32.totalorder %s34, %s35
      %p47 = scmp.eq.s32.totalorder %s18, 1
      %p48 = por %p46, %p47
      %p50 = scmp.ne.s32.totalorder %s35, %s49
      %p51 = scmp.eq.s32.totalorder %s18, 0
      %p52 = por %p50, %p51
      %s53 = ssub.s32 %s20, %s27
      %p54 = scmp.eq.s32.totalorder %s53, 0
      %s56 = sadd.s32 %s55, 1
      %s57 = scalar_select %p54, %s55, %s56
      %p60 = pneg %p54
      %p61 = scmp.eq.s32.totalorder %s12, 1
      %p62 = por %p60, %p61
      %p63 = scmp.ne.s32.totalorder %s55, %s58
      %p64 = scmp.eq.s32.totalorder %s12, 0
      %p65 = por %p63, %p64
      %p66 = scmp.ne.s32.totalorder %s55, %s58
      %p67 = scmp.eq.s32.totalorder %s17, 1
      %p68 = por %p66, %p67
      %p69 = scmp.ne.s32.totalorder %s58, %s59
      %p70 = scmp.eq.s32.totalorder %s17, 0
      %p71 = por %p69, %p70
      %p72 = scmp.ne.s32.totalorder %s58, %s59
      %p73 = scmp.eq.s32.totalorder %s18, 1
      %p74 = por %p72, %p73
      %p76 = scmp.ne.s32.totalorder %s59, %s75
      %p77 = scmp.eq.s32.totalorder %s18, 0
      %p78 = por %p76, %p77
      %s79 = ssub.s32 %s19, %s31
      %p80 = scmp.eq.s32.totalorder %s79, 0
      %s82 = sadd.s32 %s81, 1
      %s83 = scalar_select %p80, %s81, %s82
      %p86 = pneg %p80
      %p87 = scmp.eq.s32.totalorder %s12, 1
      %p88 = por %p86, %p87
      %p89 = scmp.ne.s32.totalorder %s81, %s84
      %p90 = scmp.eq.s32.totalorder %s12, 0
      %p91 = por %p89, %p90
      %p92 = scmp.ne.s32.totalorder %s81, %s84
      %p93 = scmp.eq.s32.totalorder %s17, 1
      %p94 = por %p92, %p93
      %p95 = scmp.ne.s32.totalorder %s84, %s85
      %p96 = scmp.eq.s32.totalorder %s17, 0
      %p97 = por %p95, %p96
      %p98 = scmp.ne.s32.totalorder %s84, %s85
      %p99 = scmp.eq.s32.totalorder %s18, 1
      %p100 = por %p98, %p99
      %p102 = scmp.ne.s32.totalorder %s85, %s101
      %p103 = scmp.eq.s32.totalorder %s18, 0
      %p104 = por %p102, %p103
      %s105 = ssub.s32 %s19, %s31
      %s106 = ssub.s32 %s20, %s27
      %s107 = sor.u32 %s105, %s106
      %p108 = scmp.eq.s32.totalorder %s107, 0
      %s110 = sadd.s32 %s109, 1
      %s111 = scalar_select %p108, %s109, %s110
      %p114 = pneg %p108
      %p115 = scmp.eq.s32.totalorder %s12, 1
      %p116 = por %p114, %p115
      %p117 = scmp.ne.s32.totalorder %s109, %s112
      %p118 = scmp.eq.s32.totalorder %s12, 0
      %p119 = por %p117, %p118
      %p120 = scmp.ne.s32.totalorder %s109, %s112
      %p121 = scmp.eq.s32.totalorder %s17, 1
      %p122 = por %p120, %p121
      %p123 = scmp.ne.s32.totalorder %s112, %s113
      %p124 = scmp.eq.s32.totalorder %s17, 0
      %p125 = por %p123, %p124
      %p126 = scmp.ne.s32.totalorder %s112, %s113
      %p127 = scmp.eq.s32.totalorder %s18, 1
      %p128 = por %p126, %p127
      %p130 = scmp.ne.s32.totalorder %s113, %s129
      %p131 = scmp.eq.s32.totalorder %s18, 0
      %p132 = por %p130, %p131
      %p133 = scmp.le.s32.totalorder 1, %s12
      %p134 = scmp.lt.s32.totalorder %s12, 3
      %p135 = pnand %p133, %p134
      %p136 = pneg %p135
      // Predicated region
      $region9: #{random_affine.3} parent=5 // pred_check
        _
      $region10: #{random_affine.3} parent=5 // pred_check_branch
        %138 = sbr.rel (%p135) target = $region12
      $region11: #{random_affine.3} parent=5 // pred_region
        %s139 = ssub.s32 %s12, 1
        // Predicated region
        $region13: #{random_affine.3} parent=11 // pred_check
          %p140 = pneg %p45
        $region14: #{random_affine.3} parent=11 // pred_check_branch
          %142 = sbr.rel (%p140) target = $region16
        $region15: #{random_affine.3} parent=11 // pred_region
          _
        $region16: #{random_affine.3} parent=11 // pred_fallthru
          _
        // Predicated region
        $region17: #{random_affine.3} parent=11 // pred_check
          %p143 = pneg %p71
        $region18: #{random_affine.3} parent=11 // pred_check_branch
          %145 = sbr.rel (%p143) target = $region20
        $region19: #{random_affine.3} parent=11 // pred_region
          %p146 = scmp.lt.s32.totalorder %s22, 0
          %s147 = scalar_select %p146, %s22, 0
          %s148 = smul.addr %s147, 8
          %s149 = scalar_lea.vmem %s1, %s148
        $region20: #{random_affine.3} parent=11 // pred_fallthru
          _
      $region12: #{random_affine.3} parent=5 // pred_fallthru
        _
      %p150 = scmp.lt.s32.totalorder %s12, 2
      // Predicated region
      $region21: #{random_affine.3} parent=5 // pred_check
        %p151 = pneg %p150
      $region22: #{random_affine.3} parent=5 // pred_check_branch
        %153 = sbr.rel (%p151) target = $region24
      $region23: #{random_affine.3} parent=5 // pred_region
        // Predicated region
        $region25: #{random_affine.3} parent=23 // pred_check
          %p154 = pneg %p91
        $region26: #{random_affine.3} parent=23 // pred_check_branch
          %156 = sbr.rel (%p154) target = $region28
        $region27: #{random_affine.3} parent=23 // pred_region
          %s157 = smul.u32 4, %s19
          %p158 = scmp.lt.s32.totalorder %s157, 7
          %s159 = scalar_select %p158, %s157, 7
          %s160 = smul.addr %s159, 2
          %s161 = smul.addr %s160, 8
          %s162 = scalar_lea.vmem %s2, %s161
          %s163 = smul.u32 4, %s19
        $region28: #{random_affine.3} parent=23 // pred_fallthru
          _
      $region24: #{random_affine.3} parent=5 // pred_fallthru
        _
      %p164 = scmp.le.s32.totalorder 1, %s12
      %p165 = scmp.lt.s32.totalorder %s12, 3
      %p166 = pnand %p164, %p165
      %p167 = pneg %p166
      // Predicated region
      $region29: #{random_affine.3} parent=5 // pred_check
        _
      $region30: #{random_affine.3} parent=5 // pred_check_branch
        %169 = sbr.rel (%p166) target = $region32
      $region31: #{random_affine.3} parent=5 // pred_region
        %s170 = ssub.s32 %s12, 1
        %p171 = pneg %p45
        %p172 = pneg %p42
        %p173 = scmp.lt.s32.totalorder %s22, 0
        %s174 = scalar_select %p173, %s22, 0
        %s175 = smul.addr %s174, 8
        %s176 = scalar_lea.vmem %s1, %s175
        %p177 = pneg %p71
        %p178 = pneg %p68
        %s179 = smul.u32 4, %s21
        %p180 = scmp.lt.s32.totalorder %s179, 7
        %s181 = scalar_select %p180, %s179, 7
        %s182 = smul.addr %s181, 2
        %s183 = smul.addr %s182, 8
        %s184 = scalar_lea.vmem %s2, %s183
        %p185 = pneg %p97
        %p186 = pneg %p94
        %p187 = pneg %p125
        %p188 = pneg %p122
        %s189 = sand.u32 %s112, 1
        %s190 = scalar_lea.sflag [#allocation3], %s189
        %s191 = sand.u32 %s112, 1
        %s192 = smul.addr %s191, 64
        %s193 = scalar_lea.vmem [#allocation2], %s192
        %p194 = scmp.lt.s32.totalorder %s22, 0
        %s195 = scalar_select %p194, %s22, 0
        %s196 = smul.addr %s195, 8
        %s197 = scalar_lea.vmem %s1, %s196
        %s198 = smul.u32 4, %s21
        %p199 = scmp.lt.s32.totalorder %s198, 7
        %s200 = scalar_select %p199, %s198, 7
        %s201 = smul.addr %s200, 2
        %s202 = smul.addr %s201, 8
        %s203 = scalar_lea.vmem %s2, %s202
        %s204 = smul.u32 4, %s21
        %s205 = smul.u32 4, %s21
        %v206 = vld [vmem:[%s0] sm:$0xff]
        %v207 = vld [vmem:[%s0 + $0x8] sm:$0xff]
        %v208 = vld [vmem:[%s197] sm:$0xff]
        %v209 = vld [vmem:[%s197 + $0x8] sm:$0xff]
        %v210 = vld [vmem:[%s203] sm:$0xff]
        %v211 = vld [vmem:[%s203 + $0x8] sm:$0xff]
        %vm212 = vcmask 130048
        %v214 = vsel %vm212, %v210, 0
        %v217 = vsel %vm212, %v211, 0
        %219 = vmatprep.subr.mxu0 0.0
        %220 = vmatpush1.msra.mxu0 0.0
        %221 = vmatprep.subr.mxu0 0.0
        %222 = vmatpush1.msra.mxu0 0.0
        %223 = vmatprep.subr.mxu0 0.0
        %224 = vmatpush1.msra.mxu0 0.0
        %225 = vmatprep.subr.mxu0 0.0
        %226 = vmatpush1.msra.mxu0 0.0
        %227 = vmatprep.subr.mxu0 0.0
        %228 = vmatpush1.msra.mxu0 0.0
        %229 = vmatprep.subr.mxu0 0.0
        %230 = vmatpush1.msra.mxu0 0.0
        %231 = vmatprep.subr.mxu0 0.0
        %232 = vmatpush1.msra.mxu0 0.0
        %233 = vmatprep.subr.mxu0 0.0
        %234 = vmatpush1.msra.mxu0 0.0
        %235 = vmatprep.subr.mxu0 0.0
        %236 = vmatpush1.msra.mxu0 0.0
        %237 = vmatprep.subr.mxu0 0.0
        %238 = vmatpush1.msra.mxu0 0.0
        %239 = vmatprep.subr.mxu0 0.0
        %240 = vmatpush1.msra.mxu0 0.0
        %241 = vmatprep.subr.mxu0 0.0
        %242 = vmatpush1.msra.mxu0 0.0
        %243 = vmatprep.subr.mxu0 0.0
        %244 = vmatpush1.msra.mxu0 0.0
        %245 = vmatprep.subr.mxu0 0.0
        %246 = vmatpush1.msra.mxu0 0.0
        %247 = vmatprep.subr.mxu0 0.0
        %248 = vmatpush1.msra.mxu0 %v209
        %249 = vmatprep.subr.mxu0 0.0
        %250 = vmatpush1.msra.mxu0 %v208
        %251 = vmatprep.subr.mxu0 0.0
        %252 = vmatpush2.msra.mxu0 0.0
        %253 = vmatprep.subr.mxu0 0.0
        %254 = vmatpush2.msra.mxu0 0.0
        %255 = vmatprep.subr.mxu0 0.0
        %256 = vmatpush2.msra.mxu0 0.0
        %257 = vmatprep.subr.mxu0 0.0
        %258 = vmatpush2.msra.mxu0 0.0
        %259 = vmatprep.subr.mxu0 0.0
        %260 = vmatpush2.msra.mxu0 0.0
        %261 = vmatprep.subr.mxu0 0.0
        %262 = vmatpush2.msra.mxu0 0.0
        %263 = vmatprep.subr.mxu0 0.0
        %264 = vmatpush2.msra.mxu0 0.0
        %265 = vmatprep.subr.mxu0 0.0
        %266 = vmatpush2.msra.mxu0 0.0
        %267 = vmatprep.subr.mxu0 0.0
        %268 = vmatpush2.msra.mxu0 0.0
        %269 = vmatprep.subr.mxu0 0.0
        %270 = vmatpush2.msra.mxu0 0.0
        %271 = vmatprep.subr.mxu0 0.0
        %272 = vmatpush2.msra.mxu0 0.0
        %273 = vmatprep.subr.mxu0 0.0
        %274 = vmatpush2.msra.mxu0 0.0
        %275 = vmatprep.subr.mxu0 0.0
        %276 = vmatpush2.msra.mxu0 0.0
        %277 = vmatprep.subr.mxu0 0.0
        %278 = vmatpush2.msra.mxu0 0.0
        %279 = vmatprep.subr.mxu0 0.0
        %280 = vmatpush2.msra.mxu0 0.0
        %281 = vmatprep.subr.mxu0 0.0
        %282 = vmatpush2.msra.mxu0 0.0
        %283 = vmatprep.mubr.f32.mxu0 0.0
        %284 = vmatmul.mubr.f32.gmra.mxu0 %v214
        %v285 = vpop.f32.mrf.mxu0
        %v286 = vadd.f32 0.0, %v285
        %v287 = vpop.f32.mrf.mxu0
        %288 = vmatprep.mubr.f32.mxu0 0.0
        %289 = vmatmul.mubr.f32.gmra.mxu0 %v217
        %v290 = vpop.f32.mrf.mxu0
        %v291 = vadd.f32 0.0, %v290
        %v292 = vpop.f32.mrf.mxu0
        %293 = vdwg.mxu0
        %v295 = vsel %vm212, %v206, 0
        %v298 = vsel %vm212, %v207, 0
        %300 = vmatprep.subr.mxu0 0.0
        %301 = vmatpush1.msra.mxu0 0.0
        %302 = vmatprep.subr.mxu0 0.0
        %303 = vmatpush1.msra.mxu0 0.0
        %304 = vmatprep.subr.mxu0 0.0
        %305 = vmatpush1.msra.mxu0 0.0
        %306 = vmatprep.subr.mxu0 0.0
        %307 = vmatpush1.msra.mxu0 0.0
        %308 = vmatprep.subr.mxu0 0.0
        %309 = vmatpush1.msra.mxu0 0.0
        %310 = vmatprep.subr.mxu0 0.0
        %311 = vmatpush1.msra.mxu0 0.0
        %312 = vmatprep.subr.mxu0 0.0
        %313 = vmatpush1.msra.mxu0 0.0
        %314 = vmatprep.subr.mxu0 0.0
        %315 = vmatpush1.msra.mxu0 0.0
        %316 = vmatprep.subr.mxu0 0.0
        %317 = vmatpush1.msra.mxu0 0.0
        %318 = vmatprep.subr.mxu0 0.0
        %319 = vmatpush1.msra.mxu0 0.0
        %320 = vmatprep.subr.mxu0 0.0
        %321 = vmatpush1.msra.mxu0 0.0
        %322 = vmatprep.subr.mxu0 0.0
        %323 = vmatpush1.msra.mxu0 0.0
        %324 = vmatprep.subr.mxu0 0.0
        %325 = vmatpush1.msra.mxu0 0.0
        %326 = vmatprep.subr.mxu0 0.0
        %327 = vmatpush1.msra.mxu0 0.0
        %328 = vmatprep.subr.mxu0 0.0
        %329 = vmatpush1.msra.mxu0 %v291
        %330 = vmatprep.subr.mxu0 0.0
        %331 = vmatpush1.msra.mxu0 %v286
        %332 = vmatprep.subr.mxu0 0.0
        %333 = vmatpush2.msra.mxu0 0.0
        %334 = vmatprep.subr.mxu0 0.0
        %335 = vmatpush2.msra.mxu0 0.0
        %336 = vmatprep.subr.mxu0 0.0
        %337 = vmatpush2.msra.mxu0 0.0
        %338 = vmatprep.subr.mxu0 0.0
        %339 = vmatpush2.msra.mxu0 0.0
        %340 = vmatprep.subr.mxu0 0.0
        %341 = vmatpush2.msra.mxu0 0.0
        %342 = vmatprep.subr.mxu0 0.0
        %343 = vmatpush2.msra.mxu0 0.0
        %344 = vmatprep.subr.mxu0 0.0
        %345 = vmatpush2.msra.mxu0 0.0
        %346 = vmatprep.subr.mxu0 0.0
        %347 = vmatpush2.msra.mxu0 0.0
        %348 = vmatprep.subr.mxu0 0.0
        %349 = vmatpush2.msra.mxu0 0.0
        %350 = vmatprep.subr.mxu0 0.0
        %351 = vmatpush2.msra.mxu0 0.0
        %352 = vmatprep.subr.mxu0 0.0
        %353 = vmatpush2.msra.mxu0 0.0
        %354 = vmatprep.subr.mxu0 0.0
        %355 = vmatpush2.msra.mxu0 0.0
        %356 = vmatprep.subr.mxu0 0.0
        %357 = vmatpush2.msra.mxu0 0.0
        %358 = vmatprep.subr.mxu0 0.0
        %359 = vmatpush2.msra.mxu0 0.0
        %360 = vmatprep.subr.mxu0 0.0
        %361 = vmatpush2.msra.mxu0 0.0
        %362 = vmatprep.subr.mxu0 0.0
        %363 = vmatpush2.msra.mxu0 0.0
        %364 = vmatprep.mubr.f32.mxu0 0.0
        %365 = vmatmul.mubr.f32.gmra.mxu0 %v295
        %v366 = vpop.f32.mrf.mxu0
        %v367 = vadd.f32 0.0, %v366
        %v368 = vpop.f32.mrf.mxu0
        %369 = vmatprep.mubr.f32.mxu0 0.0
        %370 = vmatmul.mubr.f32.gmra.mxu0 %v298
        %v371 = vpop.f32.mrf.mxu0
        %v372 = vadd.f32 0.0, %v371
        %v373 = vpop.f32.mrf.mxu0
        %374 = vdwg.mxu0
        %375 = vst.msk [vmem:[%s193] sm:$0xff] %vm212, %v367
        %376 = vst.msk [vmem:[%s193 + $0x8] sm:$0xff] %vm212, %v372
        %s377 = scalar_lea.vmem %s203, 16
        %v378 = vld [vmem:[%s377] sm:$0xff]
        %v379 = vld [vmem:[%s377 + $0x8] sm:$0xff]
        %v381 = vsel %vm212, %v378, 0
        %v384 = vsel %vm212, %v379, 0
        %386 = vmatprep.subr.mxu0 0.0
        %387 = vmatpush1.msra.mxu0 0.0
        %388 = vmatprep.subr.mxu0 0.0
        %389 = vmatpush1.msra.mxu0 0.0
        %390 = vmatprep.subr.mxu0 0.0
        %391 = vmatpush1.msra.mxu0 0.0
        %392 = vmatprep.subr.mxu0 0.0
        %393 = vmatpush1.msra.mxu0 0.0
        %394 = vmatprep.subr.mxu0 0.0
        %395 = vmatpush1.msra.mxu0 0.0
        %396 = vmatprep.subr.mxu0 0.0
        %397 = vmatpush1.msra.mxu0 0.0
        %398 = vmatprep.subr.mxu0 0.0
        %399 = vmatpush1.msra.mxu0 0.0
        %400 = vmatprep.subr.mxu0 0.0
        %401 = vmatpush1.msra.mxu0 0.0
        %402 = vmatprep.subr.mxu0 0.0
        %403 = vmatpush1.msra.mxu0 0.0
        %404 = vmatprep.subr.mxu0 0.0
        %405 = vmatpush1.msra.mxu0 0.0
        %406 = vmatprep.subr.mxu0 0.0
        %407 = vmatpush1.msra.mxu0 0.0
        %408 = vmatprep.subr.mxu0 0.0
        %409 = vmatpush1.msra.mxu0 0.0
        %410 = vmatprep.subr.mxu0 0.0
        %411 = vmatpush1.msra.mxu0 0.0
        %412 = vmatprep.subr.mxu0 0.0
        %413 = vmatpush1.msra.mxu0 0.0
        %414 = vmatprep.subr.mxu0 0.0
        %415 = vmatpush1.msra.mxu0 %v209
        %416 = vmatprep.subr.mxu0 0.0
        %417 = vmatpush1.msra.mxu0 %v208
        %418 = vmatprep.subr.mxu0 0.0
        %419 = vmatpush2.msra.mxu0 0.0
        %420 = vmatprep.subr.mxu0 0.0
        %421 = vmatpush2.msra.mxu0 0.0
        %422 = vmatprep.subr.mxu0 0.0
        %423 = vmatpush2.msra.mxu0 0.0
        %424 = vmatprep.subr.mxu0 0.0
        %425 = vmatpush2.msra.mxu0 0.0
        %426 = vmatprep.subr.mxu0 0.0
        %427 = vmatpush2.msra.mxu0 0.0
        %428 = vmatprep.subr.mxu0 0.0
        %429 = vmatpush2.msra.mxu0 0.0
        %430 = vmatprep.subr.mxu0 0.0
        %431 = vmatpush2.msra.mxu0 0.0
        %432 = vmatprep.subr.mxu0 0.0
        %433 = vmatpush2.msra.mxu0 0.0
        %434 = vmatprep.subr.mxu0 0.0
        %435 = vmatpush2.msra.mxu0 0.0
        %436 = vmatprep.subr.mxu0 0.0
        %437 = vmatpush2.msra.mxu0 0.0
        %438 = vmatprep.subr.mxu0 0.0
        %439 = vmatpush2.msra.mxu0 0.0
        %440 = vmatprep.subr.mxu0 0.0
        %441 = vmatpush2.msra.mxu0 0.0
        %442 = vmatprep.subr.mxu0 0.0
        %443 = vmatpush2.msra.mxu0 0.0
        %444 = vmatprep.subr.mxu0 0.0
        %445 = vmatpush2.msra.mxu0 0.0
        %446 = vmatprep.subr.mxu0 0.0
        %447 = vmatpush2.msra.mxu0 0.0
        %448 = vmatprep.subr.mxu0 0.0
        %449 = vmatpush2.msra.mxu0 0.0
        %450 = vmatprep.mubr.f32.mxu0 0.0
        %451 = vmatmul.mubr.f32.gmra.mxu0 %v381
        %v452 = vpop.f32.mrf.mxu0
        %v453 = vadd.f32 0.0, %v452
        %v454 = vpop.f32.mrf.mxu0
        %455 = vmatprep.mubr.f32.mxu0 0.0
        %456 = vmatmul.mubr.f32.gmra.mxu0 %v384
        %v457 = vpop.f32.mrf.mxu0
        %v458 = vadd.f32 0.0, %v457
        %v459 = vpop.f32.mrf.mxu0
        %460 = vdwg.mxu0
        %461 = vmatprep.subr.mxu0 0.0
        %462 = vmatpush1.msra.mxu0 0.0
        %463 = vmatprep.subr.mxu0 0.0
        %464 = vmatpush1.msra.mxu0 0.0
        %465 = vmatprep.subr.mxu0 0.0
        %466 = vmatpush1.msra.mxu0 0.0
        %467 = vmatprep.subr.mxu0 0.0
        %468 = vmatpush1.msra.mxu0 0.0
        %469 = vmatprep.subr.mxu0 0.0
        %470 = vmatpush1.msra.mxu0 0.0
        %471 = vmatprep.subr.mxu0 0.0
        %472 = vmatpush1.msra.mxu0 0.0
        %473 = vmatprep.subr.mxu0 0.0
        %474 = vmatpush1.msra.mxu0 0.0
        %475 = vmatprep.subr.mxu0 0.0
        %476 = vmatpush1.msra.mxu0 0.0
        %477 = vmatprep.subr.mxu0 0.0
        %478 = vmatpush1.msra.mxu0 0.0
        %479 = vmatprep.subr.mxu0 0.0
        %480 = vmatpush1.msra.mxu0 0.0
        %481 = vmatprep.subr.mxu0 0.0
        %482 = vmatpush1.msra.mxu0 0.0
        %483 = vmatprep.subr.mxu0 0.0
        %484 = vmatpush1.msra.mxu0 0.0
        %485 = vmatprep.subr.mxu0 0.0
        %486 = vmatpush1.msra.mxu0 0.0
        %487 = vmatprep.subr.mxu0 0.0
        %488 = vmatpush1.msra.mxu0 0.0
        %489 = vmatprep.subr.mxu0 0.0
        %490 = vmatpush1.msra.mxu0 %v458
        %491 = vmatprep.subr.mxu0 0.0
        %492 = vmatpush1.msra.mxu0 %v453
        %493 = vmatprep.subr.mxu0 0.0
        %494 = vmatpush2.msra.mxu0 0.0
        %495 = vmatprep.subr.mxu0 0.0
        %496 = vmatpush2.msra.mxu0 0.0
        %497 = vmatprep.subr.mxu0 0.0
        %498 = vmatpush2.msra.mxu0 0.0
        %499 = vmatprep.subr.mxu0 0.0
        %500 = vmatpush2.msra.mxu0 0.0
        %501 = vmatprep.subr.mxu0 0.0
        %502 = vmatpush2.msra.mxu0 0.0
        %503 = vmatprep.subr.mxu0 0.0
        %504 = vmatpush2.msra.mxu0 0.0
        %505 = vmatprep.subr.mxu0 0.0
        %506 = vmatpush2.msra.mxu0 0.0
        %507 = vmatprep.subr.mxu0 0.0
        %508 = vmatpush2.msra.mxu0 0.0
        %509 = vmatprep.subr.mxu0 0.0
        %510 = vmatpush2.msra.mxu0 0.0
        %511 = vmatprep.subr.mxu0 0.0
        %512 = vmatpush2.msra.mxu0 0.0
        %513 = vmatprep.subr.mxu0 0.0
        %514 = vmatpush2.msra.mxu0 0.0
        %515 = vmatprep.subr.mxu0 0.0
        %516 = vmatpush2.msra.mxu0 0.0
        %517 = vmatprep.subr.mxu0 0.0
        %518 = vmatpush2.msra.mxu0 0.0
        %519 = vmatprep.subr.mxu0 0.0
        %520 = vmatpush2.msra.mxu0 0.0
        %521 = vmatprep.subr.mxu0 0.0
        %522 = vmatpush2.msra.mxu0 0.0
        %523 = vmatprep.subr.mxu0 0.0
        %524 = vmatpush2.msra.mxu0 0.0
        %525 = vmatprep.mubr.f32.mxu0 0.0
        %526 = vmatmul.mubr.f32.gmra.mxu0 %v295
        %v527 = vpop.f32.mrf.mxu0
        %v528 = vadd.f32 0.0, %v527
        %v529 = vpop.f32.mrf.mxu0
        %530 = vmatprep.mubr.f32.mxu0 0.0
        %531 = vmatmul.mubr.f32.gmra.mxu0 %v298
        %v532 = vpop.f32.mrf.mxu0
        %v533 = vadd.f32 0.0, %v532
        %v534 = vpop.f32.mrf.mxu0
        %535 = vdwg.mxu0
        %s536 = scalar_lea.vmem %s193, 16 [#allocation2]
        %537 = vst.msk [vmem:[%s536] sm:$0xff] %vm212, %v528
        %538 = vst.msk [vmem:[%s536 + $0x8] sm:$0xff] %vm212, %v533
        %s539 = scalar_lea.vmem %s203, 32
        %v540 = vld [vmem:[%s539] sm:$0xff]
        %v541 = vld [vmem:[%s539 + $0x8] sm:$0xff]
        %v543 = vsel %vm212, %v540, 0
        %v546 = vsel %vm212, %v541, 0
        %548 = vmatprep.subr.mxu0 0.0
        %549 = vmatpush1.msra.mxu0 0.0
        %550 = vmatprep.subr.mxu0 0.0
        %551 = vmatpush1.msra.mxu0 0.0
        %552 = vmatprep.subr.mxu0 0.0
        %553 = vmatpush1.msra.mxu0 0.0
        %554 = vmatprep.subr.mxu0 0.0
        %555 = vmatpush1.msra.mxu0 0.0
        %556 = vmatprep.subr.mxu0 0.0
        %557 = vmatpush1.msra.mxu0 0.0
        %558 = vmatprep.subr.mxu0 0.0
        %559 = vmatpush1.msra.mxu0 0.0
        %560 = vmatprep.subr.mxu0 0.0
        %561 = vmatpush1.msra.mxu0 0.0
        %562 = vmatprep.subr.mxu0 0.0
        %563 = vmatpush1.msra.mxu0 0.0
        %564 = vmatprep.subr.mxu0 0.0
        %565 = vmatpush1.msra.mxu0 0.0
        %566 = vmatprep.subr.mxu0 0.0
        %567 = vmatpush1.msra.mxu0 0.0
        %568 = vmatprep.subr.mxu0 0.0
        %569 = vmatpush1.msra.mxu0 0.0
        %570 = vmatprep.subr.mxu0 0.0
        %571 = vmatpush1.msra.mxu0 0.0
        %572 = vmatprep.subr.mxu0 0.0
        %573 = vmatpush1.msra.mxu0 0.0
        %574 = vmatprep.subr.mxu0 0.0
        %575 = vmatpush1.msra.mxu0 0.0
        %576 = vmatprep.subr.mxu0 0.0
        %577 = vmatpush1.msra.mxu0 %v209
        %578 = vmatprep.subr.mxu0 0.0
        %579 = vmatpush1.msra.mxu0 %v208
        %580 = vmatprep.subr.mxu0 0.0
        %581 = vmatpush2.msra.mxu0 0.0
        %582 = vmatprep.subr.mxu0 0.0
        %583 = vmatpush2.msra.mxu0 0.0
        %584 = vmatprep.subr.mxu0 0.0
        %585 = vmatpush2.msra.mxu0 0.0
        %586 = vmatprep.subr.mxu0 0.0
        %587 = vmatpush2.msra.mxu0 0.0
        %588 = vmatprep.subr.mxu0 0.0
        %589 = vmatpush2.msra.mxu0 0.0
        %590 = vmatprep.subr.mxu0 0.0
        %591 = vmatpush2.msra.mxu0 0.0
        %592 = vmatprep.subr.mxu0 0.0
        %593 = vmatpush2.msra.mxu0 0.0
        %594 = vmatprep.subr.mxu0 0.0
        %595 = vmatpush2.msra.mxu0 0.0
        %596 = vmatprep.subr.mxu0 0.0
        %597 = vmatpush2.msra.mxu0 0.0
        %598 = vmatprep.subr.mxu0 0.0
        %599 = vmatpush2.msra.mxu0 0.0
        %600 = vmatprep.subr.mxu0 0.0
        %601 = vmatpush2.msra.mxu0 0.0
        %602 = vmatprep.subr.mxu0 0.0
        %603 = vmatpush2.msra.mxu0 0.0
        %604 = vmatprep.subr.mxu0 0.0
        %605 = vmatpush2.msra.mxu0 0.0
        %606 = vmatprep.subr.mxu0 0.0
        %607 = vmatpush2.msra.mxu0 0.0
        %608 = vmatprep.subr.mxu0 0.0
        %609 = vmatpush2.msra.mxu0 0.0
        %610 = vmatprep.subr.mxu0 0.0
        %611 = vmatpush2.msra.mxu0 0.0
        %612 = vmatprep.mubr.f32.mxu0 0.0
        %613 = vmatmul.mubr.f32.gmra.mxu0 %v543
        %v614 = vpop.f32.mrf.mxu0
        %v615 = vadd.f32 0.0, %v614
        %v616 = vpop.f32.mrf.mxu0
        %617 = vmatprep.mubr.f32.mxu0 0.0
        %618 = vmatmul.mubr.f32.gmra.mxu0 %v546
        %v619 = vpop.f32.mrf.mxu0
        %v620 = vadd.f32 0.0, %v619
        %v621 = vpop.f32.mrf.mxu0
        %622 = vdwg.mxu0
        %623 = vmatprep.subr.mxu0 0.0
        %624 = vmatpush1.msra.mxu0 0.0
        %625 = vmatprep.subr.mxu0 0.0
        %626 = vmatpush1.msra.mxu0 0.0
        %627 = vmatprep.subr.mxu0 0.0
        %628 = vmatpush1.msra.mxu0 0.0
        %629 = vmatprep.subr.mxu0 0.0
        %630 = vmatpush1.msra.mxu0 0.0
        %631 = vmatprep.subr.mxu0 0.0
        %632 = vmatpush1.msra.mxu0 0.0
        %633 = vmatprep.subr.mxu0 0.0
        %634 = vmatpush1.msra.mxu0 0.0
        %635 = vmatprep.subr.mxu0 0.0
        %636 = vmatpush1.msra.mxu0 0.0
        %637 = vmatprep.subr.mxu0 0.0
        %638 = vmatpush1.msra.mxu0 0.0
        %639 = vmatprep.subr.mxu0 0.0
        %640 = vmatpush1.msra.mxu0 0.0
        %641 = vmatprep.subr.mxu0 0.0
        %642 = vmatpush1.msra.mxu0 0.0
        %643 = vmatprep.subr.mxu0 0.0
        %644 = vmatpush1.msra.mxu0 0.0
        %645 = vmatprep.subr.mxu0 0.0
        %646 = vmatpush1.msra.mxu0 0.0
        %647 = vmatprep.subr.mxu0 0.0
        %648 = vmatpush1.msra.mxu0 0.0
        %649 = vmatprep.subr.mxu0 0.0
        %650 = vmatpush1.msra.mxu0 0.0
        %651 = vmatprep.subr.mxu0 0.0
        %652 = vmatpush1.msra.mxu0 %v620
        %653 = vmatprep.subr.mxu0 0.0
        %654 = vmatpush1.msra.mxu0 %v615
        %655 = vmatprep.subr.mxu0 0.0
        %656 = vmatpush2.msra.mxu0 0.0
        %657 = vmatprep.subr.mxu0 0.0
        %658 = vmatpush2.msra.mxu0 0.0
        %659 = vmatprep.subr.mxu0 0.0
        %660 = vmatpush2.msra.mxu0 0.0
        %661 = vmatprep.subr.mxu0 0.0
        %662 = vmatpush2.msra.mxu0 0.0
        %663 = vmatprep.subr.mxu0 0.0
        %664 = vmatpush2.msra.mxu0 0.0
        %665 = vmatprep.subr.mxu0 0.0
        %666 = vmatpush2.msra.mxu0 0.0
        %667 = vmatprep.subr.mxu0 0.0
        %668 = vmatpush2.msra.mxu0 0.0
        %669 = vmatprep.subr.mxu0 0.0
        %670 = vmatpush2.msra.mxu0 0.0
        %671 = vmatprep.subr.mxu0 0.0
        %672 = vmatpush2.msra.mxu0 0.0
        %673 = vmatprep.subr.mxu0 0.0
        %674 = vmatpush2.msra.mxu0 0.0
        %675 = vmatprep.subr.mxu0 0.0
        %676 = vmatpush2.msra.mxu0 0.0
        %677 = vmatprep.subr.mxu0 0.0
        %678 = vmatpush2.msra.mxu0 0.0
        %679 = vmatprep.subr.mxu0 0.0
        %680 = vmatpush2.msra.mxu0 0.0
        %681 = vmatprep.subr.mxu0 0.0
        %682 = vmatpush2.msra.mxu0 0.0
        %683 = vmatprep.subr.mxu0 0.0
        %684 = vmatpush2.msra.mxu0 0.0
        %685 = vmatprep.subr.mxu0 0.0
        %686 = vmatpush2.msra.mxu0 0.0
        %687 = vmatprep.mubr.f32.mxu0 0.0
        %688 = vmatmul.mubr.f32.gmra.mxu0 %v295
        %v689 = vpop.f32.mrf.mxu0
        %v690 = vadd.f32 0.0, %v689
        %v691 = vpop.f32.mrf.mxu0
        %692 = vmatprep.mubr.f32.mxu0 0.0
        %693 = vmatmul.mubr.f32.gmra.mxu0 %v298
        %v694 = vpop.f32.mrf.mxu0
        %v695 = vadd.f32 0.0, %v694
        %v696 = vpop.f32.mrf.mxu0
        %697 = vdwg.mxu0
        %s698 = scalar_lea.vmem %s193, 32 [#allocation2]
        %699 = vst.msk [vmem:[%s698] sm:$0xff] %vm212, %v690
        %700 = vst.msk [vmem:[%s698 + $0x8] sm:$0xff] %vm212, %v695
        %s701 = scalar_lea.vmem %s203, 48
        %v702 = vld [vmem:[%s701] sm:$0xff]
        %v703 = vld [vmem:[%s701 + $0x8] sm:$0xff]
        %v705 = vsel %vm212, %v702, 0
        %v708 = vsel %vm212, %v703, 0
        %710 = vmatprep.subr.mxu0 0.0
        %711 = vmatpush1.msra.mxu0 0.0
        %712 = vmatprep.subr.mxu0 0.0
        %713 = vmatpush1.msra.mxu0 0.0
        %714 = vmatprep.subr.mxu0 0.0
        %715 = vmatpush1.msra.mxu0 0.0
        %716 = vmatprep.subr.mxu0 0.0
        %717 = vmatpush1.msra.mxu0 0.0
        %718 = vmatprep.subr.mxu0 0.0
        %719 = vmatpush1.msra.mxu0 0.0
        %720 = vmatprep.subr.mxu0 0.0
        %721 = vmatpush1.msra.mxu0 0.0
        %722 = vmatprep.subr.mxu0 0.0
        %723 = vmatpush1.msra.mxu0 0.0
        %724 = vmatprep.subr.mxu0 0.0
        %725 = vmatpush1.msra.mxu0 0.0
        %726 = vmatprep.subr.mxu0 0.0
        %727 = vmatpush1.msra.mxu0 0.0
        %728 = vmatprep.subr.mxu0 0.0
        %729 = vmatpush1.msra.mxu0 0.0
        %730 = vmatprep.subr.mxu0 0.0
        %731 = vmatpush1.msra.mxu0 0.0
        %732 = vmatprep.subr.mxu0 0.0
        %733 = vmatpush1.msra.mxu0 0.0
        %734 = vmatprep.subr.mxu0 0.0
        %735 = vmatpush1.msra.mxu0 0.0
        %736 = vmatprep.subr.mxu0 0.0
        %737 = vmatpush1.msra.mxu0 0.0
        %738 = vmatprep.subr.mxu0 0.0
        %739 = vmatpush1.msra.mxu0 %v209
        %740 = vmatprep.subr.mxu0 0.0
        %741 = vmatpush1.msra.mxu0 %v208
        %742 = vmatprep.subr.mxu0 0.0
        %743 = vmatpush2.msra.mxu0 0.0
        %744 = vmatprep.subr.mxu0 0.0
        %745 = vmatpush2.msra.mxu0 0.0
        %746 = vmatprep.subr.mxu0 0.0
        %747 = vmatpush2.msra.mxu0 0.0
        %748 = vmatprep.subr.mxu0 0.0
        %749 = vmatpush2.msra.mxu0 0.0
        %750 = vmatprep.subr.mxu0 0.0
        %751 = vmatpush2.msra.mxu0 0.0
        %752 = vmatprep.subr.mxu0 0.0
        %753 = vmatpush2.msra.mxu0 0.0
        %754 = vmatprep.subr.mxu0 0.0
        %755 = vmatpush2.msra.mxu0 0.0
        %756 = vmatprep.subr.mxu0 0.0
        %757 = vmatpush2.msra.mxu0 0.0
        %758 = vmatprep.subr.mxu0 0.0
        %759 = vmatpush2.msra.mxu0 0.0
        %760 = vmatprep.subr.mxu0 0.0
        %761 = vmatpush2.msra.mxu0 0.0
        %762 = vmatprep.subr.mxu0 0.0
        %763 = vmatpush2.msra.mxu0 0.0
        %764 = vmatprep.subr.mxu0 0.0
        %765 = vmatpush2.msra.mxu0 0.0
        %766 = vmatprep.subr.mxu0 0.0
        %767 = vmatpush2.msra.mxu0 0.0
        %768 = vmatprep.subr.mxu0 0.0
        %769 = vmatpush2.msra.mxu0 0.0
        %770 = vmatprep.subr.mxu0 0.0
        %771 = vmatpush2.msra.mxu0 0.0
        %772 = vmatprep.subr.mxu0 0.0
        %773 = vmatpush2.msra.mxu0 0.0
        %774 = vmatprep.mubr.f32.mxu0 0.0
        %775 = vmatmul.mubr.f32.gmra.mxu0 %v705
        %v776 = vpop.f32.mrf.mxu0
        %v777 = vadd.f32 0.0, %v776
        %v778 = vpop.f32.mrf.mxu0
        %779 = vmatprep.mubr.f32.mxu0 0.0
        %780 = vmatmul.mubr.f32.gmra.mxu0 %v708
        %v781 = vpop.f32.mrf.mxu0
        %v782 = vadd.f32 0.0, %v781
        %v783 = vpop.f32.mrf.mxu0
        %784 = vdwg.mxu0
        %785 = vmatprep.subr.mxu0 0.0
        %786 = vmatpush1.msra.mxu0 0.0
        %787 = vmatprep.subr.mxu0 0.0
        %788 = vmatpush1.msra.mxu0 0.0
        %789 = vmatprep.subr.mxu0 0.0
        %790 = vmatpush1.msra.mxu0 0.0
        %791 = vmatprep.subr.mxu0 0.0
        %792 = vmatpush1.msra.mxu0 0.0
        %793 = vmatprep.subr.mxu0 0.0
        %794 = vmatpush1.msra.mxu0 0.0
        %795 = vmatprep.subr.mxu0 0.0
        %796 = vmatpush1.msra.mxu0 0.0
        %797 = vmatprep.subr.mxu0 0.0
        %798 = vmatpush1.msra.mxu0 0.0
        %799 = vmatprep.subr.mxu0 0.0
        %800 = vmatpush1.msra.mxu0 0.0
        %801 = vmatprep.subr.mxu0 0.0
        %802 = vmatpush1.msra.mxu0 0.0
        %803 = vmatprep.subr.mxu0 0.0
        %804 = vmatpush1.msra.mxu0 0.0
        %805 = vmatprep.subr.mxu0 0.0
        %806 = vmatpush1.msra.mxu0 0.0
        %807 = vmatprep.subr.mxu0 0.0
        %808 = vmatpush1.msra.mxu0 0.0
        %809 = vmatprep.subr.mxu0 0.0
        %810 = vmatpush1.msra.mxu0 0.0
        %811 = vmatprep.subr.mxu0 0.0
        %812 = vmatpush1.msra.mxu0 0.0
        %813 = vmatprep.subr.mxu0 0.0
        %814 = vmatpush1.msra.mxu0 %v782
        %815 = vmatprep.subr.mxu0 0.0
        %816 = vmatpush1.msra.mxu0 %v777
        %817 = vmatprep.subr.mxu0 0.0
        %818 = vmatpush2.msra.mxu0 0.0
        %819 = vmatprep.subr.mxu0 0.0
        %820 = vmatpush2.msra.mxu0 0.0
        %821 = vmatprep.subr.mxu0 0.0
        %822 = vmatpush2.msra.mxu0 0.0
        %823 = vmatprep.subr.mxu0 0.0
        %824 = vmatpush2.msra.mxu0 0.0
        %825 = vmatprep.subr.mxu0 0.0
        %826 = vmatpush2.msra.mxu0 0.0
        %827 = vmatprep.subr.mxu0 0.0
        %828 = vmatpush2.msra.mxu0 0.0
        %829 = vmatprep.subr.mxu0 0.0
        %830 = vmatpush2.msra.mxu0 0.0
        %831 = vmatprep.subr.mxu0 0.0
        %832 = vmatpush2.msra.mxu0 0.0
        %833 = vmatprep.subr.mxu0 0.0
        %834 = vmatpush2.msra.mxu0 0.0
        %835 = vmatprep.subr.mxu0 0.0
        %836 = vmatpush2.msra.mxu0 0.0
        %837 = vmatprep.subr.mxu0 0.0
        %838 = vmatpush2.msra.mxu0 0.0
        %839 = vmatprep.subr.mxu0 0.0
        %840 = vmatpush2.msra.mxu0 0.0
        %841 = vmatprep.subr.mxu0 0.0
        %842 = vmatpush2.msra.mxu0 0.0
        %843 = vmatprep.subr.mxu0 0.0
        %844 = vmatpush2.msra.mxu0 0.0
        %845 = vmatprep.subr.mxu0 0.0
        %846 = vmatpush2.msra.mxu0 0.0
        %847 = vmatprep.subr.mxu0 0.0
        %848 = vmatpush2.msra.mxu0 0.0
        %849 = vmatprep.mubr.f32.mxu0 0.0
        %850 = vmatmul.mubr.f32.gmra.mxu0 %v295
        %v851 = vpop.f32.mrf.mxu0
        %v852 = vadd.f32 0.0, %v851
        %v853 = vpop.f32.mrf.mxu0
        %854 = vmatprep.mubr.f32.mxu0 0.0
        %855 = vmatmul.mubr.f32.gmra.mxu0 %v298
        %v856 = vpop.f32.mrf.mxu0
        %v857 = vadd.f32 0.0, %v856
        %v858 = vpop.f32.mrf.mxu0
        %859 = vdwg.mxu0
        %s860 = scalar_lea.vmem %s193, 48 [#allocation2]
        %861 = vst.msk [vmem:[%s860] sm:$0xff] %vm212, %v852
        %862 = vst.msk [vmem:[%s860 + $0x8] sm:$0xff] %vm212, %v857
        %s863 = sand.u32 %s112, 1
        %s864 = scalar_lea.sflag [#allocation3], %s863
        %s865 = sand.u32 %s112, 1
        %s866 = smul.addr %s865, 64
        %s867 = scalar_lea.vmem [#allocation2], %s866
        // Predicated region
        $region33: #{random_affine.3} parent=31 // pred_check
          %p868 = pneg %p122
        $region34: #{random_affine.3} parent=31 // pred_check_branch
          %870 = sbr.rel (%p868) target = $region36
        $region35: #{random_affine.3} parent=31 // pred_region
          %s871 = smul.u32 4, %s21
          %s873 = ssub.s32 1024, 1024
          %874 = vsyncadd %s864, %s873
          %s875 = smul.addr %s871, 2
          %s876 = sadd.s32 %s22, %s875
          %s877 = smul.addr %s876, 128
          %s878 = scalar_lea.hbm %s3, %s877
          %s879 = sshll.u32 %s867, 4
          %s880 = int_to_ptr.vmem [resolvable:$true] %s879
          %885 = dma.vmem_to_hbm [thread:$0]  %s880, 1024, %s878, %s864, 128, 128, 8
        $region36: #{random_affine.3} parent=31 // pred_fallthru
          _
      $region32: #{random_affine.3} parent=5 // pred_fallthru
        _
      %p886 = scmp.le.s32.totalorder 2, %s12
      // Predicated region
      $region37: #{random_affine.3} parent=5 // pred_check
        %p887 = pneg %p886
      $region38: #{random_affine.3} parent=5 // pred_check_branch
        %889 = sbr.rel (%p887) target = $region40
      $region39: #{random_affine.3} parent=5 // pred_region
        %s890 = ssub.s32 %s12, 2
        // Predicated region
        $region41: #{random_affine.3} parent=39 // pred_check
          %p891 = pneg %p128
        $region42: #{random_affine.3} parent=39 // pred_check_branch
          %893 = sbr.rel (%p891) target = $region44
        $region43: #{random_affine.3} parent=39 // pred_region
          %s894 = sand.u32 %s113, 1
          %s895 = scalar_lea.sflag [#allocation3], %s894
          %s896 = sand.u32 %s113, 1
          %s897 = smul.addr %s896, 64
          %s898 = scalar_lea.vmem [#allocation2], %s897
          %899 = dma.done %s895, 1024
        $region44: #{random_affine.3} parent=39 // pred_fallthru
          _
      $region40: #{random_affine.3} parent=5 // pred_fallthru
        _
    $region6: #{random_affine.3} parent=1 // loop_footer
      %s16 = sadd.s32 1, %s12
    $region7: #{random_affine.3} parent=1 // loop_footer_branch
      %11 = sbr.rel target = $region3
    $region8: #{random_affine.3} parent=1 // loop_exit
      _
    %900 = vsyncpa [#allocation3], 1
    %s901 = scalar_lea.sflag [#allocation3], 1
    %902 = vsyncpa %s901, 1

</llo_original>
